<compile_context>
chip_gen: v5e
topology: v5e:2x2
jax: 0.10.0
libtpu: 0.0.40
codegen_flags: <defaults>
</compile_context>

<pallas_src>
import functools
from typing import NamedTuple

import jax
import jax.numpy as jnp
from jax.experimental import pallas as pl
from jax.experimental.pallas import tpu as pltpu


def _round_up(x: int, m: int) -> int:
    return (x + m - 1) // m * m


def _cdiv(a: int, b: int) -> int:
    return -(-a // b)


# Per-generation roofline targets: (TM, TN, TK, vmem_limit_bytes).
#   v5e : 197 TF/s vs 0.82 TB/s -> ~240 FLOP/B  -> 512x512 tiles, tk=1024
#   v6e : 918 TF/s vs ~1.4 TB/s -> ~660 FLOP/B  -> 1024x2048 tiles, tk=512
#   v7x : 996 TF/s vs 3.2 TB/s  -> ~310 FLOP/B  -> 1024x1024 tiles, 64 MiB/TC VMEM
_TILE_TARGETS = {
    "v5": (512, 512, 1024, 96 * 2**20),
    "v6": (1024, 2048, 512, 100 * 2**20),
    "v7": (1024, 1024, 512, 48 * 2**20),
}
_DEFAULT_TARGET = (512, 1024, 512, 48 * 2**20)  # unknown chip: safe, still roofline-ish


def _tpu_generation() -> str:
    try:
        kind = jax.devices()[0].device_kind.lower()
    except Exception:
        return "unknown"
    for tag in ("v5", "v6", "v7"):
        if tag in kind:
            return tag
    return "unknown"


def _pick_tile(dim: int, target: int, align: int) -> tuple[int, int]:
    """Pick (tile, padded_extent): tile is a multiple of `align`, close to
    `target`, and divides padded_extent — bounding pad waste to <align per
    block instead of up to a whole clamped tile."""
    padded0 = _round_up(dim, align)
    nblocks = _cdiv(padded0, min(target, padded0))
    tile = _round_up(_cdiv(padded0, nblocks), align)
    padded = _round_up(padded0, tile)
    return tile, padded


class LinearPlan(NamedTuple):
    n: int
    dim_in: int
    dim_out: int
    tm: int
    tk: int
    tn: int
    m_pad: int
    k_pad: int
    n_pad: int
    precast_x_bf16: bool   # cast x to bf16 outside kernel (x is re-streamed per N block)
    vmem_limit: int


def plan_linear(n: int, dim_in: int, dim_out: int) -> LinearPlan:
    gen = _tpu_generation()
    TM, TN, TK, vmem_limit = _TILE_TARGETS.get(gen, _DEFAULT_TARGET)

    tm, m_pad = _pick_tile(n, TM, 16)         # 16: native bf16 (16,128) sublane pack
    tk, k_pad = _pick_tile(dim_in, TK, 128)   # lane-aligned K
    tn, n_pad = _pick_tile(dim_out, TN, 128)  # lane-dense output / MXU N

    # v7x has 2 TensorCores/chip: make sure a 'parallel' axis has >= 2 blocks
    # when the problem is large enough, so the second core isn't idle.
    if gen == "v7" and (m_pad // tm) * (n_pad // tn) == 1 \
            and _round_up(dim_out, 128) >= 256:
        tn, n_pad = _pick_tile(dim_out, max(128, tn // 2), 128)

    # Few N blocks -> x tiles revisited <=3 times: keep x f32 and cast in-kernel
    # (4 B/elem once) instead of a separate cast pass (4+2+2 B/elem).
    precast_x_bf16 = (n_pad // tn) > 3

    return LinearPlan(n, dim_in, dim_out, tm, tk, tn, m_pad, k_pad, n_pad,
                      precast_x_bf16, vmem_limit)


def prepare_linear_params(weight: jax.Array, bias: jax.Array, plan: LinearPlan):
    """Pad + bf16-cast the parameters ONCE, outside the per-call hot path."""
    dim_in, dim_out = weight.shape
    assert (dim_in, dim_out) == (plan.dim_in, plan.dim_out)
    w_p = jnp.pad(
        weight, ((0, plan.k_pad - dim_in), (0, plan.n_pad - dim_out))
    ).astype(jnp.bfloat16)
    b_p = jnp.pad(bias, (0, plan.n_pad - dim_out)).astype(jnp.float32).reshape(
        1, plan.n_pad)
    return w_p, b_p


def linear_kernel(x_ref, w_ref, b_ref, o_ref):
    """One (tm, tn) output tile; K is the innermost ('arbitrary') grid axis.
    The f32 output tile itself is the accumulator (its block index (i, j) is
    constant across k, so it stays VMEM-resident) — no scratch needed."""
    k = pl.program_id(2)

    @pl.when(k == 0)
    def _zero():
        o_ref[...] = jnp.zeros_like(o_ref)

    o_ref[...] += jnp.dot(
        x_ref[...].astype(jnp.bfloat16),   # no-op if x was pre-cast to bf16
        w_ref[...],
        preferred_element_type=jnp.float32,
    )

    @pl.when(k == pl.num_programs(2) - 1)
    def _bias():
        o_ref[...] += b_ref[...]           # bias added exactly once, in the epilogue


@functools.partial(jax.jit, static_argnums=(3,))
def linear_forward(x: jax.Array, w_p: jax.Array, b_p: jax.Array,
                   plan: LinearPlan) -> jax.Array:
    """x: (n, dim_in) f32; w_p/b_p from prepare_linear_params. Returns (n, dim_out) f32."""
    n, dim_in = x.shape
    assert (n, dim_in) == (plan.n, plan.dim_in)

    x_p = jnp.pad(x, ((0, plan.m_pad - n), (0, plan.k_pad - dim_in)))
    if plan.precast_x_bf16:
        x_p = x_p.astype(jnp.bfloat16)

    tm, tk, tn = plan.tm, plan.tk, plan.tn
    grid = (plan.m_pad // tm, plan.n_pad // tn, plan.k_pad // tk)
    m_blocks, n_blocks, _ = grid

    # Honest traffic estimate: x is re-streamed once per N block, weight once
    # per M block under this grid.
    x_bytes = 2 if plan.precast_x_bf16 else 4
    bytes_accessed = (
        plan.m_pad * plan.k_pad * x_bytes * n_blocks
        + plan.k_pad * plan.n_pad * 2 * m_blocks
        + plan.n_pad * 4 * m_blocks
        + plan.m_pad * plan.n_pad * 4
    )

    out_padded = pl.pallas_call(
        linear_kernel,
        out_shape=jax.ShapeDtypeStruct((plan.m_pad, plan.n_pad), jnp.float32),
        grid_spec=pltpu.PrefetchScalarGridSpec(
            num_scalar_prefetch=0,
            grid=grid,
            in_specs=[
                pl.BlockSpec((tm, tk), lambda i, j, k: (i, k)),   # x tile
                pl.BlockSpec((tk, tn), lambda i, j, k: (k, j)),   # weight tile
                pl.BlockSpec((1, tn), lambda i, j, k: (0, j)),    # bias tile
            ],
            out_specs=pl.BlockSpec((tm, tn), lambda i, j, k: (i, j)),
        ),
        compiler_params=pltpu.CompilerParams(
            dimension_semantics=("parallel", "parallel", "arbitrary"),
            vmem_limit_bytes=plan.vmem_limit,
        ),
        cost_estimate=pl.CostEstimate(
            flops=2 * plan.m_pad * plan.k_pad * plan.n_pad,
            transcendentals=0,
            bytes_accessed=bytes_accessed,
        ),
    )(x_p, w_p, b_p)

    return out_padded[:n, :plan.dim_out]


def linear_layer(x, weight, bias, *, use_pallas: bool = True):
    """One-shot convenience wrapper with PyTorch LinearLayer.forward semantics."""
    if not use_pallas:
        # Tiny problems: XLA's fused dot beats any hand kernel's launch overhead.
        return jnp.dot(x, weight, preferred_element_type=jnp.float32) + bias
    n, dim_in = x.shape
    _, dim_out = weight.shape
    plan = plan_linear(n, dim_in, dim_out)
    w_p, b_p = prepare_linear_params(weight, bias, plan)
    return linear_forward(x, w_p, b_p, plan)


if __name__ == "__main__":
    # Small shapes consistent with the module: n=8 samples, dim_in=32, dim_out=16.
    n, dim_in, dim_out = 8, 32, 16

    key = jax.random.PRNGKey(0)
    kx, kw, kb = jax.random.split(key, 3)

    # TODO(synk): torch.Generator-seeded torch.randn init has no JAX equivalent;
    # parameters use jax.random.normal (same distribution, different stream).
    x = jax.random.normal(kx, (n, dim_in), dtype=jnp.float32)
    weight = jax.random.normal(kw, (dim_in, dim_out), dtype=jnp.float32)
    bias = jax.random.normal(kb, (dim_out,), dtype=jnp.float32)

    # Prepare the parameters once (outside the hot path), then run the kernel.
    plan = plan_linear(n, dim_in, dim_out)
    w_p, b_p = prepare_linear_params(weight, bias, plan)
    y = linear_forward(x, w_p, b_p, plan)
    jax.block_until_ready(y)
    assert y.shape == (n, dim_out)

    # Kernel-recipe reference: bf16 inputs, f32 accumulation (same as the MXU path).
    y_ref_bf16 = (
        jnp.dot(
            x.astype(jnp.bfloat16),
            weight.astype(jnp.bfloat16),
            preferred_element_type=jnp.float32,
        )
        + bias
    )
    assert jnp.allclose(y, y_ref_bf16, atol=1e-4, rtol=1e-4)

    # Forward-pass semantics check vs the full-f32 PyTorch-equivalent reference
    # (looser tolerance accounts for the bf16 input quantization on the MXU).
    y_ref_f32 = x @ weight + bias
    assert jnp.allclose(y, y_ref_f32, atol=1e-1, rtol=5e-2)

    print("KERNEL_OK")
</pallas_src>

<mosaic_0001>
module attributes {stable_mosaic.version = 11 : i64} {
  func.func @linear_kernel(%arg0: i32, %arg1: i32, %arg2: i32, %arg3: memref<16x128xf32, #tpu.memory_space<vmem>>, %arg4: memref<128x128xbf16, #tpu.memory_space<vmem>>, %arg5: memref<1x128xf32, #tpu.memory_space<vmem>>, %arg6: memref<16x128xf32, #tpu.memory_space<vmem>>) attributes {dimension_semantics = [#tpu.dimension_semantics<parallel>, #tpu.dimension_semantics<parallel>, #tpu.dimension_semantics<arbitrary>], iteration_bounds = array<i64: 1, 1, 1>, scalar_prefetch = 0 : i64, scratch_operands = 0 : i64, tpu.core_type = #tpu.core_type<tc>, window_params = [{transform_indices = @transform_0, window_bounds = array<i64: 16, 128>}, {transform_indices = @transform_1, window_bounds = array<i64: 128, 128>}, {transform_indices = @transform_2, window_bounds = array<i64: 1, 128>}, {transform_indices = @transform_3, window_bounds = array<i64: 16, 128>}]} {
    %c0_i32 = arith.constant 0 : i32
    %0 = arith.cmpi eq, %arg2, %c0_i32 : i32
    %1 = arith.extui %0 : i1 to i32
    %c0_i32_0 = arith.constant 0 : i32
    %2 = arith.cmpi ne, %1, %c0_i32_0 : i32
    scf.if %2 {
      %cst_10 = arith.constant 0.000000e+00 : f32
      %13 = vector.broadcast %cst_10 : f32 to vector<16x128xf32>
      %c0_11 = arith.constant 0 : index
      %c0_12 = arith.constant 0 : index
      %14 = vector.load %arg6[%c0_11, %c0_12] : memref<16x128xf32, #tpu.memory_space<vmem>>, vector<16x128xf32>
      tpu.vector_store %arg6[%c0_11, %c0_12], %13 {strides = array<i32>} : memref<16x128xf32, #tpu.memory_space<vmem>>, vector<16x128xf32>,
    } else {
    }
    %c0 = arith.constant 0 : index
    %c0_1 = arith.constant 0 : index
    %3 = vector.load %arg6[%c0, %c0_1] : memref<16x128xf32, #tpu.memory_space<vmem>>, vector<16x128xf32>
    %c0_2 = arith.constant 0 : index
    %c0_3 = arith.constant 0 : index
    %4 = vector.load %arg3[%c0_2, %c0_3] : memref<16x128xf32, #tpu.memory_space<vmem>>, vector<16x128xf32>
    %5 = arith.truncf %4 : vector<16x128xf32> to vector<16x128xbf16>
    %c0_4 = arith.constant 0 : index
    %c0_5 = arith.constant 0 : index
    %6 = vector.load %arg4[%c0_4, %c0_5] : memref<128x128xbf16, #tpu.memory_space<vmem>>, vector<128x128xbf16>
    %cst = arith.constant dense<0.000000e+00> : vector<16x128xf32>
    %7 = tpu.matmul %5, %6, %cst {dimension_numbers = #tpu.dot_dimension_numbers<[1], [0], [0], [1], [0, 0, 1, 1], [], []>} : vector<16x128xbf16>, vector<128x128xbf16>, vector<16x128xf32> -> vector<16x128xf32>
    %8 = arith.addf %3, %7 : vector<16x128xf32>
    %c0_6 = arith.constant 0 : index
    %c0_7 = arith.constant 0 : index
    %9 = vector.load %arg6[%c0_6, %c0_7] : memref<16x128xf32, #tpu.memory_space<vmem>>, vector<16x128xf32>
    tpu.vector_store %arg6[%c0_6, %c0_7], %8 {strides = array<i32>} : memref<16x128xf32, #tpu.memory_space<vmem>>, vector<16x128xf32>,
    %c0_i32_8 = arith.constant 0 : i32
    %10 = arith.cmpi eq, %arg2, %c0_i32_8 : i32
    %11 = arith.extui %10 : i1 to i32
    %c0_i32_9 = arith.constant 0 : i32
    %12 = arith.cmpi ne, %11, %c0_i32_9 : i32
    scf.if %12 {
      %c0_10 = arith.constant 0 : index
      %c0_11 = arith.constant 0 : index
      %13 = vector.load %arg6[%c0_10, %c0_11] : memref<16x128xf32, #tpu.memory_space<vmem>>, vector<16x128xf32>
      %c0_12 = arith.constant 0 : index
      %c0_13 = arith.constant 0 : index
      %14 = vector.load %arg5[%c0_12, %c0_13] : memref<1x128xf32, #tpu.memory_space<vmem>>, vector<1x128xf32>
      %15 = vector.broadcast %14 : vector<1x128xf32> to vector<16x128xf32>
      %16 = arith.addf %13, %15 : vector<16x128xf32>
      %c0_14 = arith.constant 0 : index
      %c0_15 = arith.constant 0 : index
      %17 = vector.load %arg6[%c0_14, %c0_15] : memref<16x128xf32, #tpu.memory_space<vmem>>, vector<16x128xf32>
      tpu.vector_store %arg6[%c0_14, %c0_15], %16 {strides = array<i32>} : memref<16x128xf32, #tpu.memory_space<vmem>>, vector<16x128xf32>,
    } else {
    }
    return
  }
  func.func @transform_0(%arg0: i32, %arg1: i32, %arg2: i32) -> (i32, i32) {
    %c0_i32 = arith.constant 0 : i32
    return %arg0, %arg2 : i32, i32
  }
  func.func @transform_1(%arg0: i32, %arg1: i32, %arg2: i32) -> (i32, i32) {
    %c0_i32 = arith.constant 0 : i32
    return %arg2, %arg1 : i32, i32
  }
  func.func @transform_2(%arg0: i32, %arg1: i32, %arg2: i32) -> (i32, i32) {
    %c0_i32 = arith.constant 0 : i32
    %c0_i32_0 = arith.constant 0 : i32
    return %c0_i32, %arg1 : i32, i32
  }
  func.func @transform_3(%arg0: i32, %arg1: i32, %arg2: i32) -> (i32, i32) {
    %c0_i32 = arith.constant 0 : i32
    return %arg0, %arg1 : i32, i32
  }
}

</mosaic_0001>

<llo_original>
// kernel: linear_forward.1
$region0: #{linear_forward.1}
  #allocation0 [shape = 'u32[]', space=smem, size = 0x4, offset = 0x4, fixed_abs, tag = 'smem constant byte address 0x4 - core index']
  #allocation1 [shape = 'u32[72,128]{1,0:T(1,128)}', space=vmem, size = 0x9000, scoped, tag = 'internal scratch']
  %s0 = inlined_call_operand.vmem [shape: f32[16,128], index: 0, kind: input, shape index: {}]
  %s1 = inlined_call_operand.hbm [shape: bf16[128,128], index: 1, kind: input, shape index: {}]
  %s2 = inlined_call_operand.vmem [shape: f32[1,128], index: 2, kind: input, shape index: {}]
  %s3 = inlined_call_operand.vmem [shape: f32[16,128], index: 3, kind: output, shape index: {}]
  %s4 = sld [smem:[#allocation0]]
  $region34: #{linear_forward.1} parent=0
    _
  %s6 = ssub.s32 1, %s4
  %s7 = scalar_select 0, %s6, %s4
  $region1: #{linear_forward.1} parent=0
    #allocation2 [shape = 'u8[32768]{0}', space=vmem, size = 0x8000, scoped, tag = 'input window, operand 1, single buffered']
    #allocation3 [shape = 's32[1]{0}', space=sflag, size = 0x4, scoped, tag = 'scoped memory for linear_forward.1']
    %8 = vsyncpa [#allocation3], 0
    // Predicated region
    $region2: #{linear_forward.1} parent=1 // pred_check
      _
    $region3: #{linear_forward.1} parent=1 // pred_check_branch
      %10 = sbr.rel (0) target = $region5
    $region4: #{linear_forward.1} parent=1 // pred_region
      _
    $region5: #{linear_forward.1} parent=1 // pred_fallthru
      _
    // Predicated region
    $region6: #{linear_forward.1} parent=1 // pred_check
      _
    $region7: #{linear_forward.1} parent=1 // pred_check_branch
      %12 = sbr.rel (0) target = $region9
    $region8: #{linear_forward.1} parent=1 // pred_region
      %14 = vsyncadd [#allocation3], 0
      %s15 = sshll.u32 %s1, 4
      %s16 = int_to_ptr.hbm [resolvable:$true] %s15
      %s17 = sshll.u32 [#allocation2], 4
      %s18 = int_to_ptr.vmem [resolvable:$true] %s17
      %23 = dma.hbm_to_vmem [thread:$0]  %s16, 1024, %s18, [#allocation3], 64, 64, 4
    $region9: #{linear_forward.1} parent=1 // pred_fallthru
      _
    // Predicated region
    $region10: #{linear_forward.1} parent=1 // pred_check
      _
    $region11: #{linear_forward.1} parent=1 // pred_check_branch
      %25 = sbr.rel (0) target = $region13
    $region12: #{linear_forward.1} parent=1 // pred_region
      _
    $region13: #{linear_forward.1} parent=1 // pred_fallthru
      _
    // Predicated region
    $region14: #{linear_forward.1} parent=1 // pred_check
      _
    $region15: #{linear_forward.1} parent=1 // pred_check_branch
      %27 = sbr.rel (0) target = $region17
    $region16: #{linear_forward.1} parent=1 // pred_region
      %29 = dma.done [#allocation3], 1024
    $region17: #{linear_forward.1} parent=1 // pred_fallthru
      _
    %p30 = scmp.eq.s32.totalorder 0, 0
    // Predicated region
    $region18: #{linear_forward.1} parent=1 // pred_check
      %p31 = pneg %p30
    $region19: #{linear_forward.1} parent=1 // pred_check_branch
      %33 = sbr.rel (%p31) target = $region21
    $region20: #{linear_forward.1} parent=1 // pred_region
      %34 = vst [vmem:[%s3] sm:$0xff] 0.0
      %35 = vst [vmem:[%s3 + $0x8] sm:$0xff] 0.0
    $region21: #{linear_forward.1} parent=1 // pred_fallthru
      _
    %v36 = vld [vmem:[%s3] sm:$0xff]
    %v37 = vld [vmem:[%s3 + $0x8] sm:$0xff]
    %v38 = vld [vmem:[%s0] sm:$0xff]
    %v39 = vld [vmem:[%s0 + $0x8] sm:$0xff]
    %v40 = vpack.c.bf16 %v39, %v38
    %v41 = vld [vmem:[#allocation2] sm:$0xf]
    %v42 = vld [vmem:[#allocation2 + $0x4] sm:$0xf]
    %v43 = vld [vmem:[#allocation2 + $0x8] sm:$0xf]
    %v44 = vld [vmem:[#allocation2 + $0xc] sm:$0xf]
    %v45 = vld [vmem:[#allocation2 + $0x10] sm:$0xf]
    %v46 = vld [vmem:[#allocation2 + $0x14] sm:$0xf]
    %v47 = vld [vmem:[#allocation2 + $0x18] sm:$0xf]
    %v48 = vld [vmem:[#allocation2 + $0x1c] sm:$0xf]
    %v49 = vld [vmem:[#allocation2 + $0x20] sm:$0xf]
    %v50 = vld [vmem:[#allocation2 + $0x24] sm:$0xf]
    %v51 = vld [vmem:[#allocation2 + $0x28] sm:$0xf]
    %v52 = vld [vmem:[#allocation2 + $0x2c] sm:$0xf]
    %v53 = vld [vmem:[#allocation2 + $0x30] sm:$0xf]
    %v54 = vld [vmem:[#allocation2 + $0x34] sm:$0xf]
    %v55 = vld [vmem:[#allocation2 + $0x38] sm:$0xf]
    %v56 = vld [vmem:[#allocation2 + $0x3c] sm:$0xf]
    %v73 = vunpack.c.l.b16 %v41
    %v74 = vunpack.c.l.b16 %v42
    %v75 = vunpack.c.l.b16 %v43
    %v76 = vunpack.c.l.b16 %v44
    %v77 = vunpack.c.l.b16 %v45
    %v78 = vunpack.c.l.b16 %v46
    %v79 = vunpack.c.l.b16 %v47
    %v80 = vunpack.c.l.b16 %v48
    %v81 = vunpack.c.l.b16 %v49
    %v82 = vunpack.c.l.b16 %v50
    %v83 = vunpack.c.l.b16 %v51
    %v84 = vunpack.c.l.b16 %v52
    %v85 = vunpack.c.l.b16 %v53
    %v86 = vunpack.c.l.b16 %v54
    %v87 = vunpack.c.l.b16 %v55
    %v88 = vunpack.c.l.b16 %v56
    %v89 = vpack.c.b16 %v74, %v73
    %v90 = vpack.c.b16 %v76, %v75
    %v91 = vpack.c.b16 %v78, %v77
    %v92 = vpack.c.b16 %v80, %v79
    %v93 = vpack.c.b16 %v82, %v81
    %v94 = vpack.c.b16 %v84, %v83
    %v95 = vpack.c.b16 %v86, %v85
    %v96 = vpack.c.b16 %v88, %v87
    %105 = vmatpush.bf16.msra.mxu0 %v96
    %106 = vmatpush.bf16.msra.mxu0 %v95
    %107 = vmatpush.bf16.msra.mxu0 %v94
    %108 = vmatpush.bf16.msra.mxu0 %v93
    %109 = vmatpush.bf16.msra.mxu0 %v92
    %110 = vmatpush.bf16.msra.mxu0 %v91
    %111 = vmatpush.bf16.msra.mxu0 %v90
    %112 = vmatpush.bf16.msra.mxu0 %v89
    %113 = vmatmul.bf16.gmra.mxu0 %v40
    %v114 = vpop.f32.mrf.mxu0
    %v115 = vadd.f32 0.0, %v114
    %v116 = vpop.f32.mrf.mxu0
    %v117 = vadd.f32 0.0, %v116
    %118 = vdwg.mxu0
    %v119 = vadd.f32 %v36, %v115
    %v120 = vadd.f32 %v37, %v117
    %121 = vst [vmem:[%s3] sm:$0xff] %v119
    %122 = vst [vmem:[%s3 + $0x8] sm:$0xff] %v120
    // Predicated region
    $region22: #{linear_forward.1} parent=1 // pred_check
      %p123 = pneg %p30
    $region23: #{linear_forward.1} parent=1 // pred_check_branch
      %125 = sbr.rel (%p123) target = $region25
    $region24: #{linear_forward.1} parent=1 // pred_region
      %v126 = vld [vmem:[%s3] sm:$0xff]
      %v127 = vld [vmem:[%s3 + $0x8] sm:$0xff]
      %v128 = vld [vmem:[%s2] sm:$0x1]
      %v130 = vperm.slane %v128, 0
      %v132 = vadd.f32 %v126, %v130
      %v133 = vadd.f32 %v127, %v130
      %134 = vst [vmem:[%s3] sm:$0xff] %v132
      %135 = vst [vmem:[%s3 + $0x8] sm:$0xff] %v133
    $region25: #{linear_forward.1} parent=1 // pred_fallthru
      _
    // Predicated region
    $region26: #{linear_forward.1} parent=1 // pred_check
      _
    $region27: #{linear_forward.1} parent=1 // pred_check_branch
      %137 = sbr.rel (0) target = $region29
    $region28: #{linear_forward.1} parent=1 // pred_region
      _
    $region29: #{linear_forward.1} parent=1 // pred_fallthru
      _
    // Predicated region
    $region30: #{linear_forward.1} parent=1 // pred_check
      _
    $region31: #{linear_forward.1} parent=1 // pred_check_branch
      %139 = sbr.rel (0) target = $region33
    $region32: #{linear_forward.1} parent=1 // pred_region
      _
    $region33: #{linear_forward.1} parent=1 // pred_fallthru
      _
    %140 = vsyncpa [#allocation3], 1

</llo_original>
